<compile_context>
chip_gen: v7x
topology: tpu7x:2x2x1
jax: 0.10.0
libtpu: 0.0.40
codegen_flags: <defaults>
</compile_context>

<pallas_src>
import numpy as np
import jax
import jax.numpy as jnp
from jax.experimental import pallas as pl
from jax.experimental.pallas import tpu as pltpu


def _grad_seq(x, S):
    """torch.gradient(x, dim=-1)[0] for a (tb, S) f32 block (S >= 2).

    Central difference in the interior, one-sided first-order at the edges.
    Uses XLU lane rotations instead of concatenated slices.
    """
    nxt = pltpu.roll(x, S - 1, 1)      # nxt[:, i] = x[:, (i + 1) % S]
    prv = pltpu.roll(x, 1, 1)          # prv[:, i] = x[:, (i - 1) % S]
    d_fwd = nxt - x                    # forward diff (valid at i = 0)
    d_bwd = x - prv                    # backward diff (valid at i = S-1)
    central = 0.5 * (d_fwd + d_bwd)
    idx = jax.lax.broadcasted_iota(jnp.int32, x.shape, 1)
    return jnp.where(idx == 0, d_fwd, jnp.where(idx == S - 1, d_bwd, central))


def _make_kernel(B, tb, S, needs_mask):
    """Kernel over one batch tile: 4 VMEM inputs, (1, 8) SMEM partial sums."""

    def kernel(zdz_ref, tgt_ref, g_ref, dr_ref, out_ref):
        f32 = jnp.float32
        tgt = tgt_ref[...].astype(f32)     # targets[..., 0]
        g = g_ref[...].astype(f32)         # g_gamma_x[..., 0]
        dr = dr_ref[...].astype(f32)       # dr_dt[..., 0]
        z0 = zdz_ref[0].astype(f32)        # z[..., 0]
        z1 = zdz_ref[1].astype(f32)        # z[..., 1]
        dz0 = zdz_ref[2].astype(f32)       # dz_dt[..., 0]
        dz1 = zdz_ref[3].astype(f32)       # dz_dt[..., 1]
        dz2 = zdz_ref[4].astype(f32)       # dz_dt[..., 2]

        if needs_mask:
            # Ragged tail block: rows past B hold unspecified data; zero their
            # differences BEFORE squaring so NaN/Inf garbage cannot propagate.
            row0 = pl.program_id(0) * tb
            ridx = jax.lax.broadcasted_iota(jnp.int32, (tb, S), 0) + row0
            valid = ridx < B

            def m(d):
                return jnp.where(valid, d, 0.0)
        else:
            def m(d):
                return d

        d1 = m(tgt - z0)                   # loss1: mse(targets, z0)
        d2 = m(_grad_seq(tgt, S) - z1)     # loss2: mse(d/dt targets, z1)
        d3 = m(dz0 - z1)                   # loss3: mse(dz0, z1)
        d4 = m(dz1 + g)                    # loss4: mse(dz1, -g)
        d5 = m(dr - dz2)                   # loss5: mse(dr, dz2)

        out_ref[0, 0] = jnp.sum(d1 * d1)
        out_ref[0, 1] = jnp.sum(d2 * d2)
        out_ref[0, 2] = jnp.sum(d3 * d3)
        out_ref[0, 3] = jnp.sum(d4 * d4)
        out_ref[0, 4] = jnp.sum(d5 * d5)
        out_ref[0, 5] = jnp.float32(0.0)
        out_ref[0, 6] = jnp.float32(0.0)
        out_ref[0, 7] = jnp.float32(0.0)

    return kernel


def _vmem_capacity_bytes():
    """Generation-aware VMEM capacity; conservative v7x fallback (64 MiB)."""
    try:
        info = pltpu.get_tpu_info()
        cap = getattr(info, "vmem_capacity_bytes", None)
        if cap:
            return int(cap)
    except Exception:
        pass
    return 64 << 20


def _choose_tb(B, bytes_per_row, align, target_block_bytes):
    """Batch tile: largest aligned tile near target_block_bytes, kept to at
    least two grid blocks when B permits (v7x: 2 TensorCores share HBM)."""
    if B < 2 * align:
        return B, 1          # block dim == full array dim is always legal
    tb = max(align, int(target_block_bytes // max(1, bytes_per_row)))
    tb = (tb // align) * align
    tb = min(tb, max(align, (B // 2 // align) * align))   # guarantee >= 2 blocks
    num_blocks = -(-B // tb)                               # cdiv
    return tb, num_blocks


def bouc_wen_loss(y_hat, targets, loss_weights=(1.0, 1.0, 1.0, 1.0, 1.0),
                  return_all=False):
    if targets.ndim != 3:
        raise ValueError("target y must have 3 dimensions. "
                         "Maybe you forgot the batch dimension?")
    # TODO(synk): eddy-current branch ('b' key) and per-sample weights / mask
    # arguments are not implemented (forward() passes None for them).
    z = y_hat["z"]
    dz = y_hat["dz_dt"]
    g = y_hat["g_gamma_x"]
    dr = y_hat["dr_dt"]
    B, S = targets.shape[0], targets.shape[1]
    if S < 2:
        raise ValueError("sequence length must be >= 2 for torch.gradient semantics")

    # Free squeezes: trailing dim is 1, so these are contiguous views (no HBM
    # gather copy).  They stay in the model dtype.
    tgt2 = targets[..., 0]
    g2 = g[..., 0]
    dr2 = dr[..., 0]
    # Only the strided z / dz_dt channels are restacked (5 channels; z[..., 2]
    # is never read).  Kept in model dtype; f32 upcast happens in the kernel.
    zdz = jnp.stack([z[..., 0], z[..., 1], dz[..., 0], dz[..., 1], dz[..., 2]],
                    axis=0)

    isz = lambda a: a.dtype.itemsize
    bytes_per_row = S * (5 * isz(zdz) + isz(tgt2) + isz(g2) + isz(dr2))
    min_item = min(isz(zdz), isz(tgt2), isz(g2), isz(dr2))
    align = {4: 8, 2: 16, 1: 32}.get(min_item, 8)   # sublane packing per dtype

    vmem_cap = _vmem_capacity_bytes()
    limit_cap = (vmem_cap * 3) // 4                 # ~48 MiB v7x, ~96 MiB v5e/v6e
    target_block_bytes = (4 << 20) if vmem_cap <= (64 << 20) else (8 << 20)

    tb, num_blocks = _choose_tb(B, bytes_per_row, align, target_block_bytes)
    needs_mask = (num_blocks * tb != B)
    block_bytes = tb * bytes_per_row
    if 2 * block_bytes + (4 << 20) > limit_cap:
        # TODO(synk): add an S-tiled path (1-element halo for the loss2
        # gradient) for extremely long sequences instead of failing here.
        raise ValueError(
            f"sequence too long for single-S blocks: 2 x {block_bytes} B "
            f"exceeds the VMEM budget of {limit_cap} B")
    vmem_limit = int(min(limit_cap, max(16 << 20, 2 * block_bytes + (4 << 20))))

    kernel = _make_kernel(B=B, tb=tb, S=S, needs_mask=needs_mask)
    bytes_accessed = (zdz.size * isz(zdz) + tgt2.size * isz(tgt2)
                      + g2.size * isz(g2) + dr2.size * isz(dr2)
                      + num_blocks * 8 * 4)

    partial = pl.pallas_call(
        kernel,
        out_shape=jax.ShapeDtypeStruct((num_blocks, 8), jnp.float32),
        grid=(num_blocks,),
        in_specs=[
            pl.BlockSpec((5, tb, S), lambda i: (0, i, 0)),
            pl.BlockSpec((tb, S), lambda i: (i, 0)),
            pl.BlockSpec((tb, S), lambda i: (i, 0)),
            pl.BlockSpec((tb, S), lambda i: (i, 0)),
        ],
        out_specs=pl.BlockSpec((1, 8), lambda i: (i, 0),
                               memory_space=pltpu.MemorySpace.SMEM),
        compiler_params=pltpu.CompilerParams(
            dimension_semantics=("parallel",),
            vmem_limit_bytes=vmem_limit),
        cost_estimate=pl.CostEstimate(
            flops=int(30 * B * S),
            transcendentals=0,
            bytes_accessed=int(bytes_accessed)),
    )(zdz, tgt2, g2, dr2)

    n = jnp.float32(B * S)                 # true element count (excludes tail pad)
    sums = jnp.sum(partial[:, :5], axis=0)
    losses = sums / n                      # (loss1 .. loss5), mean-reduced
    wvec = jnp.asarray(loss_weights, jnp.float32)
    total = jnp.sum(wvec * losses)

    if return_all:
        loss_dict = {
            "loss1": losses[0], "loss2": losses[1], "loss3": losses[2],
            "loss4": losses[3], "loss5": losses[4],
            "loss_unweighted": jnp.sum(losses), "loss": total,
        }
        return total, loss_dict
    return total


# ----------------------------------------------------------------------------
# Reference + self-test
# ----------------------------------------------------------------------------
def _np32(x):
    return np.asarray(jnp.asarray(x, jnp.float32))


def _reference(y_hat, targets, w):
    """Pure numpy reference mirroring the PyTorch module (BWOutput123 path)."""
    z = _np32(y_hat["z"])
    dz = _np32(y_hat["dz_dt"])
    g = _np32(y_hat["g_gamma_x"])
    dr = _np32(y_hat["dr_dt"])
    tgt = _np32(targets)

    l1 = np.mean((tgt[..., 0] - z[..., 0]) ** 2)
    b_dot = np.gradient(tgt[..., 0], axis=1)       # same edge handling as torch
    l2 = np.mean((b_dot - z[..., 1]) ** 2)
    l3 = np.mean((dz[..., 0] - z[..., 1]) ** 2)
    l4 = np.mean((dz[..., 1] + g[..., 0]) ** 2)    # mse(dz1, -g)
    l5 = np.mean((dr[..., 0] - dz[..., 2]) ** 2)
    a, b, c, e, k = w
    return a * l1 + b * l2 + c * l3 + e * l4 + k * l5, (l1, l2, l3, l4, l5)


def _make_inputs(key, B, S, dtype):
    k1, k2, k3, k4, k5 = jax.random.split(key, 5)
    y_hat = {
        "z": jax.random.normal(k1, (B, S, 3), dtype),
        "dz_dt": jax.random.normal(k2, (B, S, 3), dtype),
        "g_gamma_x": jax.random.normal(k3, (B, S, 1), dtype),
        "dr_dt": jax.random.normal(k4, (B, S, 1), dtype),
    }
    targets = jax.random.normal(k5, (B, S, 1), dtype)
    return y_hat, targets


if __name__ == "__main__":
    weights = (1.0, 0.5, 2.0, 1.5, 0.25)   # deterministic loss weights
    root = jax.random.PRNGKey(0)
    k1, k2, k3 = jax.random.split(root, 3)

    # Case 1: small single-block (tb == B, no tail mask), f32.
    y_hat, targets = _make_inputs(k1, 4, 128, jnp.float32)
    total, loss_dict = bouc_wen_loss(y_hat, targets, weights, return_all=True)
    total = jax.block_until_ready(total)
    ref_total, ref_terms = _reference(y_hat, targets, weights)
    np.testing.assert_allclose(np.asarray(total), ref_total, rtol=1e-4, atol=1e-6)
    for i, name in enumerate(["loss1", "loss2", "loss3", "loss4", "loss5"]):
        np.testing.assert_allclose(np.asarray(loss_dict[name]), ref_terms[i],
                                   rtol=1e-4, atol=1e-6)

    # Case 2: multi-block grid with in-kernel tail masking (B=20 -> tb=8, 3 blocks).
    y_hat2, targets2 = _make_inputs(k2, 20, 256, jnp.float32)
    total2 = jax.block_until_ready(
        bouc_wen_loss(y_hat2, targets2, weights, return_all=False))
    ref_total2, _ = _reference(y_hat2, targets2, weights)
    np.testing.assert_allclose(np.asarray(total2), ref_total2, rtol=1e-4, atol=1e-6)

    # Case 3: bf16 activations kept bf16 in HBM (align=16 -> tb=16, 3 blocks,
    # masked tail); f32 upcast + accumulation happen inside the kernel.
    y_hat3, targets3 = _make_inputs(k3, 36, 128, jnp.bfloat16)
    total3 = jax.block_until_ready(
        bouc_wen_loss(y_hat3, targets3, weights, return_all=False))
    ref_total3, _ = _reference(y_hat3, targets3, weights)
    np.testing.assert_allclose(np.asarray(total3), ref_total3, rtol=1e-3, atol=1e-5)

    print("KERNEL_OK")
</pallas_src>

<mosaic_0001>
module attributes {stable_mosaic.version = 11 : i64} {
  func.func @kernel(%arg0: i32, %arg1: memref<5x4x128xf32, #tpu.memory_space<vmem>>, %arg2: memref<4x128xf32, #tpu.memory_space<vmem>>, %arg3: memref<4x128xf32, #tpu.memory_space<vmem>>, %arg4: memref<4x128xf32, #tpu.memory_space<vmem>>, %arg5: memref<1x8xf32, #tpu.memory_space<smem>>) attributes {dimension_semantics = [#tpu.dimension_semantics<parallel>], iteration_bounds = array<i64: 1>, scalar_prefetch = 0 : i64, scratch_operands = 0 : i64, tpu.core_type = #tpu.core_type<tc>, window_params = [{transform_indices = @transform_0, window_bounds = array<i64: 5, 4, 128>}, {transform_indices = @transform_1, window_bounds = array<i64: 4, 128>}, {transform_indices = @transform_2, window_bounds = array<i64: 4, 128>}, {transform_indices = @transform_3, window_bounds = array<i64: 4, 128>}, {transform_indices = @transform_4, window_bounds = array<i64: 1, 8>}]} {
    %c0 = arith.constant 0 : index
    %c0_0 = arith.constant 0 : index
    %0 = vector.load %arg2[%c0, %c0_0] : memref<4x128xf32, #tpu.memory_space<vmem>>, vector<4x128xf32>
    %c0_1 = arith.constant 0 : index
    %c0_2 = arith.constant 0 : index
    %1 = vector.load %arg3[%c0_1, %c0_2] : memref<4x128xf32, #tpu.memory_space<vmem>>, vector<4x128xf32>
    %c0_3 = arith.constant 0 : index
    %c0_4 = arith.constant 0 : index
    %2 = vector.load %arg4[%c0_3, %c0_4] : memref<4x128xf32, #tpu.memory_space<vmem>>, vector<4x128xf32>
    %c0_5 = arith.constant 0 : index
    %c0_6 = arith.constant 0 : index
    %c0_7 = arith.constant 0 : index
    %3 = vector.load %arg1[%c0_5, %c0_6, %c0_7] : memref<5x4x128xf32, #tpu.memory_space<vmem>>, vector<1x4x128xf32>
    %4 = vector.shape_cast %3 : vector<1x4x128xf32> to vector<4x128xf32>
    %c1 = arith.constant 1 : index
    %c0_8 = arith.constant 0 : index
    %c0_9 = arith.constant 0 : index
    %5 = vector.load %arg1[%c1, %c0_8, %c0_9] : memref<5x4x128xf32, #tpu.memory_space<vmem>>, vector<1x4x128xf32>
    %6 = vector.shape_cast %5 : vector<1x4x128xf32> to vector<4x128xf32>
    %c2 = arith.constant 2 : index
    %c0_10 = arith.constant 0 : index
    %c0_11 = arith.constant 0 : index
    %7 = vector.load %arg1[%c2, %c0_10, %c0_11] : memref<5x4x128xf32, #tpu.memory_space<vmem>>, vector<1x4x128xf32>
    %8 = vector.shape_cast %7 : vector<1x4x128xf32> to vector<4x128xf32>
    %c3 = arith.constant 3 : index
    %c0_12 = arith.constant 0 : index
    %c0_13 = arith.constant 0 : index
    %9 = vector.load %arg1[%c3, %c0_12, %c0_13] : memref<5x4x128xf32, #tpu.memory_space<vmem>>, vector<1x4x128xf32>
    %10 = vector.shape_cast %9 : vector<1x4x128xf32> to vector<4x128xf32>
    %c4 = arith.constant 4 : index
    %c0_14 = arith.constant 0 : index
    %c0_15 = arith.constant 0 : index
    %11 = vector.load %arg1[%c4, %c0_14, %c0_15] : memref<5x4x128xf32, #tpu.memory_space<vmem>>, vector<1x4x128xf32>
    %12 = vector.shape_cast %11 : vector<1x4x128xf32> to vector<4x128xf32>
    %13 = arith.subf %0, %4 : vector<4x128xf32>
    %c127_i32 = arith.constant 127 : i32
    %14 = tpu.dynamic_rotate %0 by %c127_i32 dim 1 : vector<4x128xf32>, i32 -> vector<4x128xf32>
    %c1_i32 = arith.constant 1 : i32
    %15 = tpu.dynamic_rotate %0 by %c1_i32 dim 1 : vector<4x128xf32>, i32 -> vector<4x128xf32>
    %16 = arith.subf %14, %0 : vector<4x128xf32>
    %17 = arith.subf %0, %15 : vector<4x128xf32>
    %18 = arith.addf %16, %17 : vector<4x128xf32>
    %cst = arith.constant 5.000000e-01 : f32
    %19 = vector.broadcast %cst : f32 to vector<4x128xf32>
    %20 = arith.mulf %19, %18 : vector<4x128xf32>
    %21 = tpu.iota {dimensions = array<i32: 1>} : vector<4x128xi32>
    %c0_i32 = arith.constant 0 : i32
    %22 = vector.broadcast %c0_i32 : i32 to vector<4x128xi32>
    %23 = arith.cmpi eq, %21, %22 : vector<4x128xi32>
    %c127_i32_16 = arith.constant 127 : i32
    %24 = vector.broadcast %c127_i32_16 : i32 to vector<4x128xi32>
    %25 = arith.cmpi eq, %21, %24 : vector<4x128xi32>
    %26 = arith.select %25, %17, %20 : vector<4x128xi1>, vector<4x128xf32>
    %27 = arith.select %23, %16, %26 : vector<4x128xi1>, vector<4x128xf32>
    %28 = arith.subf %27, %6 : vector<4x128xf32>
    %29 = arith.subf %8, %6 : vector<4x128xf32>
    %30 = arith.addf %10, %1 : vector<4x128xf32>
    %31 = arith.subf %2, %12 : vector<4x128xf32>
    %32 = arith.mulf %13, %13 : vector<4x128xf32>
    %33 = vector.shape_cast %32 : vector<4x128xf32> to vector<1x4x128xf32>
    %cst_17 = arith.constant dense<0.000000e+00> : vector<1xf32>
    %34 = vector.multi_reduction <add>, %33, %cst_17 [1, 2] : vector<1x4x128xf32> to vector<1xf32>
    %35 = vector.shape_cast %34 : vector<1xf32> to vector<1x1x1xf32>
    %36 = vector.extract %35[0, 0, 0] : f32 from vector<1x1x1xf32>
    %c0_18 = arith.constant 0 : index
    %c0_19 = arith.constant 0 : index
    %37 = memref.load %arg5[%c0_18, %c0_19] : memref<1x8xf32, #tpu.memory_space<smem>>
    memref.store %36, %arg5[%c0_18, %c0_19] : memref<1x8xf32, #tpu.memory_space<smem>>
    %38 = arith.mulf %28, %28 : vector<4x128xf32>
    %39 = vector.shape_cast %38 : vector<4x128xf32> to vector<1x4x128xf32>
    %cst_20 = arith.constant dense<0.000000e+00> : vector<1xf32>
    %40 = vector.multi_reduction <add>, %39, %cst_20 [1, 2] : vector<1x4x128xf32> to vector<1xf32>
    %41 = vector.shape_cast %40 : vector<1xf32> to vector<1x1x1xf32>
    %42 = vector.extract %41[0, 0, 0] : f32 from vector<1x1x1xf32>
    %c0_21 = arith.constant 0 : index
    %c1_22 = arith.constant 1 : index
    %43 = memref.load %arg5[%c0_21, %c1_22] : memref<1x8xf32, #tpu.memory_space<smem>>
    memref.store %42, %arg5[%c0_21, %c1_22] : memref<1x8xf32, #tpu.memory_space<smem>>
    %44 = arith.mulf %29, %29 : vector<4x128xf32>
    %45 = vector.shape_cast %44 : vector<4x128xf32> to vector<1x4x128xf32>
    %cst_23 = arith.constant dense<0.000000e+00> : vector<1xf32>
    %46 = vector.multi_reduction <add>, %45, %cst_23 [1, 2] : vector<1x4x128xf32> to vector<1xf32>
    %47 = vector.shape_cast %46 : vector<1xf32> to vector<1x1x1xf32>
    %48 = vector.extract %47[0, 0, 0] : f32 from vector<1x1x1xf32>
    %c0_24 = arith.constant 0 : index
    %c2_25 = arith.constant 2 : index
    %49 = memref.load %arg5[%c0_24, %c2_25] : memref<1x8xf32, #tpu.memory_space<smem>>
    memref.store %48, %arg5[%c0_24, %c2_25] : memref<1x8xf32, #tpu.memory_space<smem>>
    %50 = arith.mulf %30, %30 : vector<4x128xf32>
    %51 = vector.shape_cast %50 : vector<4x128xf32> to vector<1x4x128xf32>
    %cst_26 = arith.constant dense<0.000000e+00> : vector<1xf32>
    %52 = vector.multi_reduction <add>, %51, %cst_26 [1, 2] : vector<1x4x128xf32> to vector<1xf32>
    %53 = vector.shape_cast %52 : vector<1xf32> to vector<1x1x1xf32>
    %54 = vector.extract %53[0, 0, 0] : f32 from vector<1x1x1xf32>
    %c0_27 = arith.constant 0 : index
    %c3_28 = arith.constant 3 : index
    %55 = memref.load %arg5[%c0_27, %c3_28] : memref<1x8xf32, #tpu.memory_space<smem>>
    memref.store %54, %arg5[%c0_27, %c3_28] : memref<1x8xf32, #tpu.memory_space<smem>>
    %56 = arith.mulf %31, %31 : vector<4x128xf32>
    %57 = vector.shape_cast %56 : vector<4x128xf32> to vector<1x4x128xf32>
    %cst_29 = arith.constant dense<0.000000e+00> : vector<1xf32>
    %58 = vector.multi_reduction <add>, %57, %cst_29 [1, 2] : vector<1x4x128xf32> to vector<1xf32>
    %59 = vector.shape_cast %58 : vector<1xf32> to vector<1x1x1xf32>
    %60 = vector.extract %59[0, 0, 0] : f32 from vector<1x1x1xf32>
    %c0_30 = arith.constant 0 : index
    %c4_31 = arith.constant 4 : index
    %61 = memref.load %arg5[%c0_30, %c4_31] : memref<1x8xf32, #tpu.memory_space<smem>>
    memref.store %60, %arg5[%c0_30, %c4_31] : memref<1x8xf32, #tpu.memory_space<smem>>
    %cst_32 = arith.constant 0.000000e+00 : f32
    %c0_33 = arith.constant 0 : index
    %c5 = arith.constant 5 : index
    %62 = memref.load %arg5[%c0_33, %c5] : memref<1x8xf32, #tpu.memory_space<smem>>
    memref.store %cst_32, %arg5[%c0_33, %c5] : memref<1x8xf32, #tpu.memory_space<smem>>
    %cst_34 = arith.constant 0.000000e+00 : f32
    %c0_35 = arith.constant 0 : index
    %c6 = arith.constant 6 : index
    %63 = memref.load %arg5[%c0_35, %c6] : memref<1x8xf32, #tpu.memory_space<smem>>
    memref.store %cst_34, %arg5[%c0_35, %c6] : memref<1x8xf32, #tpu.memory_space<smem>>
    %cst_36 = arith.constant 0.000000e+00 : f32
    %c0_37 = arith.constant 0 : index
    %c7 = arith.constant 7 : index
    %64 = memref.load %arg5[%c0_37, %c7] : memref<1x8xf32, #tpu.memory_space<smem>>
    memref.store %cst_36, %arg5[%c0_37, %c7] : memref<1x8xf32, #tpu.memory_space<smem>>
    return
  }
  func.func @transform_0(%arg0: i32) -> (i32, i32, i32) {
    %c0_i32 = arith.constant 0 : i32
    %c0_i32_0 = arith.constant 0 : i32
    %c0_i32_1 = arith.constant 0 : i32
    return %c0_i32, %arg0, %c0_i32_0 : i32, i32, i32
  }
  func.func @transform_1(%arg0: i32) -> (i32, i32) {
    %c0_i32 = arith.constant 0 : i32
    %c0_i32_0 = arith.constant 0 : i32
    return %arg0, %c0_i32 : i32, i32
  }
  func.func @transform_2(%arg0: i32) -> (i32, i32) {
    %c0_i32 = arith.constant 0 : i32
    %c0_i32_0 = arith.constant 0 : i32
    return %arg0, %c0_i32 : i32, i32
  }
  func.func @transform_3(%arg0: i32) -> (i32, i32) {
    %c0_i32 = arith.constant 0 : i32
    %c0_i32_0 = arith.constant 0 : i32
    return %arg0, %c0_i32 : i32, i32
  }
  func.func @transform_4(%arg0: i32) -> (i32, i32) {
    %c0_i32 = arith.constant 0 : i32
    %c0_i32_0 = arith.constant 0 : i32
    return %arg0, %c0_i32 : i32, i32
  }
}

</mosaic_0001>

<llo_original>
// kernel: tpu_custom_call.1
$region0: #{tpu_custom_call.1}
  #allocation0 [shape = 'u32[]', space=smem, size = 0x4, offset = 0x4, fixed_abs, tag = 'smem constant byte address 0x4 - core index']
  #allocation1 [shape = 'u32[144,128]{1,0:T(1,128)}', space=vmem, size = 0x12000, scoped, tag = 'internal scratch']
  %s0 = inlined_call_operand.hbm [shape: f32[5,4,128], index: 0, kind: input, shape index: {}]
  %s1 = inlined_call_operand.hbm [shape: f32[4,128], index: 1, kind: input, shape index: {}]
  %s2 = inlined_call_operand.vmem [shape: f32[4,128], index: 2, kind: input, shape index: {}]
  %s3 = inlined_call_operand.vmem [shape: f32[4,128], index: 3, kind: input, shape index: {}]
  %s4 = inlined_call_operand.hbm [shape: f32[1,8], index: 4, kind: output, shape index: {}]
  %s5 = sld [smem:[#allocation0]]
  $region34: #{tpu_custom_call.1} parent=0
    _
  %s7 = ssub.s32 1, %s5
  %s8 = scalar_select 0, %s7, %s5
  $region1: #{tpu_custom_call.1} parent=0
    #allocation2 [shape = 'u8[10240]{0}', space=vmem, size = 0x2800, scoped, tag = 'input window, operand 0, single buffered']
    #allocation3 [shape = 's32[1]{0}', space=sflag, size = 0x4, scoped, tag = 'scoped memory for tpu_custom_call.1']
    #allocation4 [shape = 's32[1]{0}', space=sflag, size = 0x4, scoped, tag = 'scoped memory for tpu_custom_call.1']
    #allocation5 [shape = 'u8[2048]{0}', space=vmem, size = 0x800, scoped, tag = 'input window, operand 1, single buffered']
    #allocation6 [shape = 's32[1]{0}', space=sflag, size = 0x4, scoped, tag = 'scoped memory for tpu_custom_call.1']
    #allocation7 [shape = 'u8[512]{0}', space=smem, size = 0x200, scoped, tag = 'output window, operand 0, single buffered']
    %9 = vsyncpa [#allocation3], 0
    %10 = vsyncpa [#allocation6], 0
    %11 = vsyncpa [#allocation4], 0
    // Predicated region
    $region2: #{tpu_custom_call.1} parent=1 // pred_check
      _
    $region3: #{tpu_custom_call.1} parent=1 // pred_check_branch
      %13 = sbr.rel (0) target = $region5
    $region4: #{tpu_custom_call.1} parent=1 // pred_region
      %s15 = ssub.s32 320, 320
      %16 = vsyncadd [#allocation3], %s15
      %s17 = sshll.u32 [#allocation2], 4
      %s18 = int_to_ptr.vmem [resolvable:$true] %s17
      %23 = dma.hbm_to_vmem [thread:$0]  %s0, 320, %s18, [#allocation3], 64, 64, 4
    $region5: #{tpu_custom_call.1} parent=1 // pred_fallthru
      _
    // Predicated region
    $region6: #{tpu_custom_call.1} parent=1 // pred_check
      _
    $region7: #{tpu_custom_call.1} parent=1 // pred_check_branch
      %25 = sbr.rel (0) target = $region9
    $region8: #{tpu_custom_call.1} parent=1 // pred_region
      %s27 = ssub.s32 64, 64
      %28 = vsyncadd [#allocation6], %s27
      %s30 = sshll.u32 [#allocation5], 4
      %s31 = int_to_ptr.vmem [resolvable:$true] %s30
      %33 = dma.hbm_to_vmem [thread:$0]  %s1, 64, %s31, [#allocation6]
    $region9: #{tpu_custom_call.1} parent=1 // pred_fallthru
      _
    // Predicated region
    $region10: #{tpu_custom_call.1} parent=1 // pred_check
      _
    $region11: #{tpu_custom_call.1} parent=1 // pred_check_branch
      %35 = sbr.rel (0) target = $region13
    $region12: #{tpu_custom_call.1} parent=1 // pred_region
      _
    $region13: #{tpu_custom_call.1} parent=1 // pred_fallthru
      _
    // Predicated region
    $region14: #{tpu_custom_call.1} parent=1 // pred_check
      _
    $region15: #{tpu_custom_call.1} parent=1 // pred_check_branch
      %37 = sbr.rel (0) target = $region17
    $region16: #{tpu_custom_call.1} parent=1 // pred_region
      _
    $region17: #{tpu_custom_call.1} parent=1 // pred_fallthru
      _
    // Predicated region
    $region18: #{tpu_custom_call.1} parent=1 // pred_check
      _
    $region19: #{tpu_custom_call.1} parent=1 // pred_check_branch
      %39 = sbr.rel (0) target = $region21
    $region20: #{tpu_custom_call.1} parent=1 // pred_region
      %40 = dma.done [#allocation3], 320
    $region21: #{tpu_custom_call.1} parent=1 // pred_fallthru
      _
    // Predicated region
    $region22: #{tpu_custom_call.1} parent=1 // pred_check
      _
    $region23: #{tpu_custom_call.1} parent=1 // pred_check_branch
      %42 = sbr.rel (0) target = $region25
    $region24: #{tpu_custom_call.1} parent=1 // pred_region
      %43 = dma.done [#allocation6], 64
    $region25: #{tpu_custom_call.1} parent=1 // pred_fallthru
      _
    %v44 = vld [vmem:[#allocation5] sm:$0xf]
    %v45 = vld [vmem:[%s2] sm:$0xf]
    %v46 = vld [vmem:[%s3] sm:$0xf]
    %v47 = vld [vmem:[#allocation2] sm:$0xf]
    %s48 = scalar_lea.vmem [#allocation2], 4
    %v49 = vld [vmem:[%s48] sm:$0xf]
    %s50 = scalar_lea.vmem [#allocation2], 8
    %v51 = vld [vmem:[%s50] sm:$0xf]
    %s52 = scalar_lea.vmem [#allocation2], 12
    %v53 = vld [vmem:[%s52] sm:$0xf]
    %s54 = scalar_lea.vmem [#allocation2], 16
    %v55 = vld [vmem:[%s54] sm:$0xf]
    %v56 = vsub.f32 %v44, %v47
    %57 = vrot.lane.b32.xlu0 %v44, 127
    %v58 = vpop.permute.xlu0 %57
    %59 = vrot.lane.b32.xlu0 %v44, 1
    %v60 = vpop.permute.xlu0 %59
    %v61 = vsub.f32 %v58, %v44
    %v62 = vsub.f32 %v44, %v60
    %v63 = vadd.f32 %v61, %v62
    %v64 = vmul.f32 %v63, 0.5
    %v65 = vlaneseq
    %v66 = vand.u32 %v65, 127
    %vm67 = vcmp.eq.s32.totalorder %v66, 0
    %vm68 = vcmp.eq.s32.totalorder %v66, 127
    %v69 = vsel %vm68, %v62, %v64
    %v70 = vsel %vm67, %v61, %v69
    %v71 = vsub.f32 %v70, %v49
    %v72 = vsub.f32 %v51, %v49
    %v73 = vadd.f32 %v53, %v45
    %v74 = vsub.f32 %v46, %v55
    %v75 = vmul.f32 %v56, %v56
    %vm76 = vcmask 1043456
    %v77 = vsel %vm76, %v75, 0.0
    %78 = vadd.xlane.f32.xlu0 %v77
    %v79 = vpop.xlane.xlu0 %78
    %v80 = vrot.slane %v79, 4
    %v81 = vadd.f32 %v79, %v80
    %v82 = vrot.slane %v81, 2
    %v83 = vadd.f32 %v81, %v82
    %v84 = vrot.slane %v83, 1
    %v85 = vadd.f32 %v83, %v84
    %s86 = vtos %v85
    %s87 = scalar_lea.smem [#allocation7], 0
    %88 = sst [smem:[%s87]] %s86
    %v89 = vmul.f32 %v71, %v71
    %v90 = vsel %vm76, %v89, 0.0
    %91 = vadd.xlane.f32.xlu0 %v90
    %v92 = vpop.xlane.xlu0 %91
    %v93 = vrot.slane %v92, 4
    %v94 = vadd.f32 %v92, %v93
    %v95 = vrot.slane %v94, 2
    %v96 = vadd.f32 %v94, %v95
    %v97 = vrot.slane %v96, 1
    %v98 = vadd.f32 %v96, %v97
    %s99 = vtos %v98
    %s100 = scalar_lea.smem [#allocation7], 1
    %101 = sst [smem:[%s100]] %s99
    %v102 = vmul.f32 %v72, %v72
    %v103 = vsel %vm76, %v102, 0.0
    %104 = vadd.xlane.f32.xlu0 %v103
    %v105 = vpop.xlane.xlu0 %104
    %v106 = vrot.slane %v105, 4
    %v107 = vadd.f32 %v105, %v106
    %v108 = vrot.slane %v107, 2
    %v109 = vadd.f32 %v107, %v108
    %v110 = vrot.slane %v109, 1
    %v111 = vadd.f32 %v109, %v110
    %s112 = vtos %v111
    %s113 = scalar_lea.smem [#allocation7], 2
    %114 = sst [smem:[%s113]] %s112
    %v115 = vmul.f32 %v73, %v73
    %v116 = vsel %vm76, %v115, 0.0
    %117 = vadd.xlane.f32.xlu0 %v116
    %v118 = vpop.xlane.xlu0 %117
    %v119 = vrot.slane %v118, 4
    %v120 = vadd.f32 %v118, %v119
    %v121 = vrot.slane %v120, 2
    %v122 = vadd.f32 %v120, %v121
    %v123 = vrot.slane %v122, 1
    %v124 = vadd.f32 %v122, %v123
    %s125 = vtos %v124
    %s126 = scalar_lea.smem [#allocation7], 3
    %127 = sst [smem:[%s126]] %s125
    %v128 = vmul.f32 %v74, %v74
    %v129 = vsel %vm76, %v128, 0.0
    %130 = vadd.xlane.f32.xlu0 %v129
    %v131 = vpop.xlane.xlu0 %130
    %v132 = vrot.slane %v131, 4
    %v133 = vadd.f32 %v131, %v132
    %v134 = vrot.slane %v133, 2
    %v135 = vadd.f32 %v133, %v134
    %v136 = vrot.slane %v135, 1
    %v137 = vadd.f32 %v135, %v136
    %s138 = vtos %v137
    %s139 = scalar_lea.smem [#allocation7], 4
    %140 = sst [smem:[%s139]] %s138
    %s141 = scalar_lea.smem [#allocation7], 5
    %142 = sst [smem:[%s141]] 0.0
    %s143 = scalar_lea.smem [#allocation7], 6
    %144 = sst [smem:[%s143]] 0.0
    %s145 = scalar_lea.smem [#allocation7], 7
    %146 = sst [smem:[%s145]] 0.0
    // Predicated region
    $region26: #{tpu_custom_call.1} parent=1 // pred_check
      _
    $region27: #{tpu_custom_call.1} parent=1 // pred_check_branch
      %148 = sbr.rel (0) target = $region29
    $region28: #{tpu_custom_call.1} parent=1 // pred_region
      %s150 = ssub.s32 16, 16
      %151 = vsyncadd [#allocation4], %s150
      %154 = dma.smem_to_hbm [#allocation7], 16, %s4, [#allocation4]
    $region29: #{tpu_custom_call.1} parent=1 // pred_fallthru
      _
    // Predicated region
    $region30: #{tpu_custom_call.1} parent=1 // pred_check
      _
    $region31: #{tpu_custom_call.1} parent=1 // pred_check_branch
      %156 = sbr.rel (0) target = $region33
    $region32: #{tpu_custom_call.1} parent=1 // pred_region
      %157 = dma.done [#allocation4], 16
    $region33: #{tpu_custom_call.1} parent=1 // pred_fallthru
      _
    %158 = sfence
    %159 = vsyncpa [#allocation3], 1
    %160 = vsyncpa [#allocation6], 1
    %161 = vsyncpa [#allocation4], 1

</llo_original>
